<compile_context>
chip_gen: v5e
topology: v5e:2x2
jax: 0.10.0
libtpu: 0.0.40
codegen_flags: <defaults>
</compile_context>

<pallas_src>
import functools

import jax
import jax.numpy as jnp
from jax import lax
from jax.experimental import pallas as pl
from jax.experimental.pallas import tpu as pltpu


# ----------------------------- Pallas kernel --------------------------------


def _vp_kernel(x_ref, w1_ref, w2_ref, p_ref, wl_ref, smask_ref, keep_ref,
               out_ref, *, shifts1, shifts2, shift_rows, compute_dtype):
    """Fused VariancePredictor forward for one lane-block of whole sequences.

    x_ref     : (H, L)        activations, channels on sublanes, time on lanes
    w1_ref    : (F, K*H)      tap-fused conv1 weight
    w2_ref    : (F, K*F)      tap-fused conv2 weight (LN1 gamma folded in)
    p_ref     : (F, 4)        packed f32 columns [b1, beta1/gamma1, b2, bl']
    wl_ref    : (1, F)        final linear weight row (LN2 gamma folded in)
    smask_ref : (n_shift, L)  0/1 boundary masks, one row per nonzero tap shift
    keep_ref  : (1, L)        1.0 at valid frames, 0.0 at padded frames
    out_ref   : (1, L)        lane-dense output row
    """
    _, L = x_ref.shape
    eps = 1e-5  # torch.nn.LayerNorm default

    p = p_ref[...]
    b1, be1p, b2 = p[:, 0:1], p[:, 1:2], p[:, 2:3]
    blp = p[0:1, 3:4]

    # Cast each needed boundary-mask row once; reused by both convs.
    rowmask = {s: smask_ref[i:i + 1, :].astype(compute_dtype)
               for s, i in shift_rows.items()}

    def conv(h, w_ref, bias, shifts):
        # h: (Cin, L) compute_dtype.  One fused (Cout, K*Cin)@(K*Cin, L) dot.
        parts = []
        for s in shifts:                      # static unroll over taps
            if s == 0:
                parts.append(h)
            else:
                hk = pltpu.roll(h, shift=(-s) % L, axis=1)   # XLU, ~free
                parts.append(hk * rowmask[s])                # zero-padding mask
        stacked = jnp.concatenate(parts, axis=0) if len(parts) > 1 else parts[0]
        return jnp.dot(w_ref[...], stacked,
                       preferred_element_type=jnp.float32) + bias

    def ln_norm(h):
        # Normalize over channels (sublanes); one-pass stats, f32.
        mu = jnp.mean(h, axis=0, keepdims=True)
        msq = jnp.mean(h * h, axis=0, keepdims=True)
        var = jnp.maximum(msq - mu * mu, 0.0)
        return (h - mu) * lax.rsqrt(var + eps)

    x = x_ref[...]

    # conv1 -> relu -> LN1 (gamma1 folded into w2; beta1/gamma1 added here so
    # conv2's zero padding at sequence boundaries stays exactly zero).
    h = conv(x, w1_ref, b1, shifts1)
    h = jnp.maximum(h, 0.0)
    h = ln_norm(h) + be1p

    # conv2 -> relu -> LN2 (gamma2/beta2 folded into the final linear).
    h = conv(h.astype(compute_dtype), w2_ref, b2, shifts2)
    h = jnp.maximum(h, 0.0)
    h = ln_norm(h)

    # Final F->1 projection on the MXU -> lane-dense (1, L) row, then mask.
    o = jnp.dot(wl_ref[...], h, preferred_element_type=jnp.float32) + blp
    out_ref[...] = (o * keep_ref[...]).astype(out_ref.dtype)


# ------------------------------- wrapper -------------------------------------


def _auto_grid_steps(B, T, min_block_lanes=512):
    """Most grid steps such that each block holds whole sequences, is
    128-lane aligned, and is at least `min_block_lanes` wide."""
    best = 1
    for g in range(1, B + 1):
        if B % g:
            continue
        lb = (B // g) * T
        if lb % 128 == 0 and lb >= min_block_lanes:
            best = g
    return best


def variance_predictor(x, mask, params, *, grid_steps=None,
                       compute_dtype=jnp.bfloat16, min_block_lanes=512):
    """x: (B, T, H) float32, mask: (B, T) bool -> (B, T) float32.

    grid_steps=None auto-tiles the lane axis into >=512-lane blocks of whole
    sequences (several pipelined steps; on v7x this also feeds both
    TensorCores).  At the tiny test shape it falls back to a single step.
    """
    B, T, H = x.shape
    w1 = params["w1"]                       # (K, F, H) taps
    K, F, _ = w1.shape

    pad1 = (K - 1) // 2
    pad2 = 1   # matches the reference Conv1d(padding=1); 'same' only for K == 3
    shifts1 = tuple(k - pad1 for k in range(K))
    shifts2 = tuple(k - pad2 for k in range(K))
    nz = sorted({s for s in shifts1 + shifts2 if s != 0})
    shift_rows = {s: i for i, s in enumerate(nz)}
    n_rows = max(1, len(nz))

    if grid_steps is None:
        grid_steps = _auto_grid_steps(B, T, min_block_lanes)
    assert B % grid_steps == 0
    bps = B // grid_steps                   # whole sequences per block
    L_blk = bps * T
    if grid_steps > 1:
        assert L_blk % 128 == 0, "lane block must be 128-aligned when tiling"

    cdt = jnp.dtype(compute_dtype)
    isz = cdt.itemsize

    # channels-last (B,T,H) -> channels-on-sublanes / time-on-lanes (H, B*T).
    x_cl = jnp.transpose(x, (2, 0, 1)).reshape(H, B * T).astype(cdt)
    keep = (~mask).reshape(1, B * T).astype(jnp.float32)

    # Tap-fused conv weights: (K, Cout, Cin) -> (Cout, K*Cin).
    w1f = jnp.transpose(w1, (1, 0, 2)).reshape(F, K * H).astype(cdt)
    # Fold LN1 gamma into conv2 along Cin (zero padding stays exactly zero).
    w2g = params["w2"] * params["g1"][None, None, :]
    w2f = jnp.transpose(w2g, (1, 0, 2)).reshape(F, K * F).astype(cdt)

    # LN affine folds.  beta1 must NOT go into conv2's bias (padded frames must
    # stay 0), so beta1/gamma1 is applied in-kernel after normalization.
    # NOTE: assumes gamma1 has no exact zeros (true for any trained LayerNorm).
    be1p = params["be1"] / params["g1"]
    wl_row = (params["wl"] * params["g2"]).astype(jnp.float32).reshape(1, F)
    blp = params["bl"][0] + jnp.dot(params["wl"], params["be2"])

    vpack = jnp.stack(
        [params["b1"], be1p, params["b2"], jnp.broadcast_to(blp, (F,))],
        axis=1).astype(jnp.float32)                          # (F, 4)

    # Static 0/1 boundary masks per tap shift; identical for every block
    # because every block contains whole sequences.
    t_in_seq = jnp.arange(L_blk, dtype=jnp.int32) % T
    rows = [((t_in_seq + s >= 0) & (t_in_seq + s <= T - 1)) for s in nz]
    if not rows:
        rows = [jnp.ones((L_blk,), jnp.bool_)]
    smask = jnp.stack(rows, axis=0).astype(jnp.float32)      # (n_rows, L_blk)

    kernel = functools.partial(
        _vp_kernel, shifts1=shifts1, shifts2=shifts2,
        shift_rows=shift_rows, compute_dtype=cdt)

    # VMEM budget (double-buffered inputs + f32 intermediates), explicit limit
    # so a v6e-sized tile never spills on v7x's 64 MiB VMEM.
    vmem_est = (2 * (H * isz + n_rows * 4 + 2 * 4) * L_blk
                + (K * max(H, F) * isz + 8 * F * 4) * L_blk
                + (F * K * (H + F)) * isz + (1 << 20))
    vmem_limit = int(min(max(2 * vmem_est, 16 << 20), 48 << 20))

    out = pl.pallas_call(
        kernel,
        out_shape=jax.ShapeDtypeStruct((1, B * T), jnp.float32),
        grid=(grid_steps,),
        in_specs=[
            pl.BlockSpec((H, L_blk), lambda g: (0, g)),        # activations
            pl.BlockSpec((F, K * H), lambda g: (0, 0)),        # conv1 weight
            pl.BlockSpec((F, K * F), lambda g: (0, 0)),        # conv2 weight
            pl.BlockSpec((F, 4), lambda g: (0, 0)),            # packed vectors
            pl.BlockSpec((1, F), lambda g: (0, 0)),            # linear row
            pl.BlockSpec((n_rows, L_blk), lambda g: (0, 0)),   # boundary masks
            pl.BlockSpec((1, L_blk), lambda g: (0, g)),        # keep mask
        ],
        out_specs=pl.BlockSpec((1, L_blk), lambda g: (0, g)),
        compiler_params=pltpu.CompilerParams(
            dimension_semantics=("parallel",),
            vmem_limit_bytes=vmem_limit),
    )(x_cl, w1f, w2f, vpack, wl_row, smask, keep)
    return out.reshape(B, T)


# --------------------------- pure-JAX reference -------------------------------


def variance_predictor_ref(x, mask, params):
    def conv(h, w, b, pad):
        B, T, _ = h.shape
        hp = jnp.pad(h, ((0, 0), (pad, pad), (0, 0)))
        y = b[None, None, :]
        for k in range(w.shape[0]):
            y = y + jnp.einsum("btc,fc->btf", hp[:, k:k + T, :], w[k],
                               precision="highest")
        return y

    def ln(h, g, b):
        mu = jnp.mean(h, axis=-1, keepdims=True)
        var = jnp.mean((h - mu) ** 2, axis=-1, keepdims=True)
        return (h - mu) / jnp.sqrt(var + 1e-5) * g + b

    K = params["w1"].shape[0]
    h = conv(x, params["w1"], params["b1"], (K - 1) // 2)
    h = jnp.maximum(h, 0.0)
    h = ln(h, params["g1"], params["be1"])
    h = conv(h, params["w2"], params["b2"], 1)
    h = jnp.maximum(h, 0.0)
    h = ln(h, params["g2"], params["be2"])
    o = jnp.einsum("btf,f->bt", h, params["wl"],
                   precision="highest") + params["bl"][0]
    return jnp.where(mask, 0.0, o)


# --------------------------------- main ---------------------------------------


if __name__ == "__main__":
    # model_config-implied sizes (small, synthetic):
    #   encoder_hidden = 32, variance filter_size = 32, kernel_size = 3
    B, T, H, F, K = 2, 16, 32, 32, 3

    key = jax.random.PRNGKey(0)
    ks = jax.random.split(key, 12)

    def xavier(k, shape, fan_in, fan_out):
        limit = (6.0 / (fan_in + fan_out)) ** 0.5
        return jax.random.uniform(k, shape, jnp.float32, -limit, limit)

    params = {
        # conv weights stored as (K, Cout, Cin) == torch (Cout, Cin, K) taps
        "w1": xavier(ks[0], (K, F, H), H * K, F * K),
        "b1": jax.random.normal(ks[1], (F,), jnp.float32) * 0.02,
        "g1": 1.0 + 0.1 * jax.random.normal(ks[2], (F,), jnp.float32),
        "be1": jax.random.normal(ks[3], (F,), jnp.float32) * 0.02,
        "w2": xavier(ks[4], (K, F, F), F * K, F * K),
        "b2": jax.random.normal(ks[5], (F,), jnp.float32) * 0.02,
        "g2": 1.0 + 0.1 * jax.random.normal(ks[6], (F,), jnp.float32),
        "be2": jax.random.normal(ks[7], (F,), jnp.float32) * 0.02,
        "wl": xavier(ks[8], (F,), F, 1),
        "bl": jax.random.normal(ks[9], (1,), jnp.float32) * 0.02,
    }

    x = jax.random.normal(ks[10], (B, T, H), jnp.float32)
    mask = jax.random.uniform(ks[11], (B, T)) > 0.7  # bool padding mask

    ref = variance_predictor_ref(x, mask, params)

    # Float32 mode: tight agreement with the f32 reference.
    out_f32 = variance_predictor(x, mask, params, compute_dtype=jnp.float32)
    out_f32 = jax.block_until_ready(out_f32)
    assert out_f32.shape == (B, T)
    assert bool(jnp.allclose(out_f32, ref, atol=5e-3, rtol=5e-3)), \
        "f32 mismatch vs reference"

    # Default optimized path: bf16 MXU operands, f32 accumulation / LN stats.
    out_bf16 = variance_predictor(x, mask, params)
    out_bf16 = jax.block_until_ready(out_bf16)
    assert out_bf16.shape == (B, T)
    assert bool(jnp.allclose(out_bf16, ref, atol=1e-1, rtol=1e-1)), \
        "bf16 mismatch vs reference"

    print("KERNEL_OK")
</pallas_src>

<mosaic_0001>
module attributes {stable_mosaic.version = 11 : i64} {
  func.func @_vp_kernel(%arg0: i32, %arg1: memref<32x32xf32, #tpu.memory_space<vmem>>, %arg2: memref<32x96xf32, #tpu.memory_space<vmem>>, %arg3: memref<32x96xf32, #tpu.memory_space<vmem>>, %arg4: memref<32x4xf32, #tpu.memory_space<vmem>>, %arg5: memref<1x32xf32, #tpu.memory_space<vmem>>, %arg6: memref<2x32xf32, #tpu.memory_space<vmem>>, %arg7: memref<1x32xf32, #tpu.memory_space<vmem>>, %arg8: memref<1x32xf32, #tpu.memory_space<vmem>>) attributes {dimension_semantics = [#tpu.dimension_semantics<parallel>], iteration_bounds = array<i64: 1>, scalar_prefetch = 0 : i64, scratch_operands = 0 : i64, tpu.core_type = #tpu.core_type<tc>, window_params = [{transform_indices = @transform_0, window_bounds = array<i64: 32, 32>}, {pipeline_mode = #tpu.pipeline_mode<synchronous>, transform_indices = @transform_1, window_bounds = array<i64: 32, 96>}, {pipeline_mode = #tpu.pipeline_mode<synchronous>, transform_indices = @transform_2, window_bounds = array<i64: 32, 96>}, {pipeline_mode = #tpu.pipeline_mode<synchronous>, transform_indices = @transform_3, window_bounds = array<i64: 32, 4>}, {pipeline_mode = #tpu.pipeline_mode<synchronous>, transform_indices = @transform_4, window_bounds = array<i64: 1, 32>}, {pipeline_mode = #tpu.pipeline_mode<synchronous>, transform_indices = @transform_5, window_bounds = array<i64: 2, 32>}, {transform_indices = @transform_6, window_bounds = array<i64: 1, 32>}, {transform_indices = @transform_7, window_bounds = array<i64: 1, 32>}]} {
    %c0 = arith.constant 0 : index
    %c0_0 = arith.constant 0 : index
    %0 = vector.load %arg4[%c0, %c0_0] : memref<32x4xf32, #tpu.memory_space<vmem>>, vector<32x4xf32>
    %1 = vector.extract_strided_slice %0 {offsets = [0, 0], sizes = [32, 1], strides = [1, 1]} : vector<32x4xf32> to vector<32x1xf32>
    %2 = vector.extract_strided_slice %0 {offsets = [0, 1], sizes = [32, 1], strides = [1, 1]} : vector<32x4xf32> to vector<32x1xf32>
    %3 = vector.extract_strided_slice %0 {offsets = [0, 2], sizes = [32, 1], strides = [1, 1]} : vector<32x4xf32> to vector<32x1xf32>
    %4 = vector.extract_strided_slice %0 {offsets = [0, 3], sizes = [1, 1], strides = [1, 1]} : vector<32x4xf32> to vector<1x1xf32>
    %c0_1 = arith.constant 0 : index
    %c0_2 = arith.constant 0 : index
    %5 = vector.load %arg6[%c0_1, %c0_2] : memref<2x32xf32, #tpu.memory_space<vmem>>, vector<1x32xf32>
    %c1 = arith.constant 1 : index
    %c0_3 = arith.constant 0 : index
    %6 = vector.load %arg6[%c1, %c0_3] : memref<2x32xf32, #tpu.memory_space<vmem>>, vector<1x32xf32>
    %c0_4 = arith.constant 0 : index
    %c0_5 = arith.constant 0 : index
    %7 = vector.load %arg1[%c0_4, %c0_5] : memref<32x32xf32, #tpu.memory_space<vmem>>, vector<32x32xf32>
    %c1_i32 = arith.constant 1 : i32
    %8 = tpu.dynamic_rotate %7 by %c1_i32 dim 1 : vector<32x32xf32>, i32 -> vector<32x32xf32>
    %9 = vector.broadcast %5 : vector<1x32xf32> to vector<32x32xf32>
    %10 = arith.mulf %8, %9 : vector<32x32xf32>
    %c31_i32 = arith.constant 31 : i32
    %11 = tpu.dynamic_rotate %7 by %c31_i32 dim 1 : vector<32x32xf32>, i32 -> vector<32x32xf32>
    %12 = vector.broadcast %6 : vector<1x32xf32> to vector<32x32xf32>
    %13 = arith.mulf %11, %12 : vector<32x32xf32>
    %14 = tpu.concatenate %10, %7, %13 in 0 : vector<32x32xf32>, vector<32x32xf32>, vector<32x32xf32> -> vector<96x32xf32>
    %c0_6 = arith.constant 0 : index
    %c0_7 = arith.constant 0 : index
    %15 = vector.load %arg2[%c0_6, %c0_7] : memref<32x96xf32, #tpu.memory_space<vmem>>, vector<32x96xf32>
    %cst = arith.constant dense<0.000000e+00> : vector<32x32xf32>
    %16 = tpu.matmul %15, %14, %cst {dimension_numbers = #tpu.dot_dimension_numbers<[1], [0], [0], [1], [0, 0, 1, 1], [], []>} : vector<32x96xf32>, vector<96x32xf32>, vector<32x32xf32> -> vector<32x32xf32>
    %17 = vector.broadcast %1 : vector<32x1xf32> to vector<32x32xf32>
    %18 = arith.addf %16, %17 : vector<32x32xf32>
    %cst_8 = arith.constant 0.000000e+00 : f32
    %19 = vector.broadcast %cst_8 : f32 to vector<32x32xf32>
    %20 = arith.maximumf %18, %19 : vector<32x32xf32>
    %cst_9 = arith.constant dense<0.000000e+00> : vector<32xf32>
    %21 = vector.multi_reduction <add>, %20, %cst_9 [0] : vector<32x32xf32> to vector<32xf32>
    %22 = vector.shape_cast %21 : vector<32xf32> to vector<1x32xf32>
    %cst_10 = arith.constant 3.200000e+01 : f32
    %23 = vector.broadcast %cst_10 : f32 to vector<1x32xf32>
    %24 = arith.divf %22, %23 : vector<1x32xf32>
    %25 = arith.mulf %20, %20 : vector<32x32xf32>
    %cst_11 = arith.constant dense<0.000000e+00> : vector<32xf32>
    %26 = vector.multi_reduction <add>, %25, %cst_11 [0] : vector<32x32xf32> to vector<32xf32>
    %27 = vector.shape_cast %26 : vector<32xf32> to vector<1x32xf32>
    %cst_12 = arith.constant 3.200000e+01 : f32
    %28 = vector.broadcast %cst_12 : f32 to vector<1x32xf32>
    %29 = arith.divf %27, %28 : vector<1x32xf32>
    %30 = arith.mulf %24, %24 : vector<1x32xf32>
    %31 = arith.subf %29, %30 : vector<1x32xf32>
    %cst_13 = arith.constant 0.000000e+00 : f32
    %32 = vector.broadcast %cst_13 : f32 to vector<1x32xf32>
    %33 = arith.maximumf %31, %32 : vector<1x32xf32>
    %34 = vector.broadcast %24 : vector<1x32xf32> to vector<32x32xf32>
    %35 = arith.subf %20, %34 : vector<32x32xf32>
    %cst_14 = arith.constant 9.99999974E-6 : f32
    %36 = vector.broadcast %cst_14 : f32 to vector<1x32xf32>
    %37 = arith.addf %33, %36 : vector<1x32xf32>
    %38 = math.rsqrt %37 : vector<1x32xf32>
    %39 = vector.broadcast %38 : vector<1x32xf32> to vector<32x32xf32>
    %40 = arith.mulf %35, %39 : vector<32x32xf32>
    %41 = vector.broadcast %2 : vector<32x1xf32> to vector<32x32xf32>
    %42 = arith.addf %40, %41 : vector<32x32xf32>
    %c1_i32_15 = arith.constant 1 : i32
    %43 = tpu.dynamic_rotate %42 by %c1_i32_15 dim 1 : vector<32x32xf32>, i32 -> vector<32x32xf32>
    %44 = vector.broadcast %5 : vector<1x32xf32> to vector<32x32xf32>
    %45 = arith.mulf %43, %44 : vector<32x32xf32>
    %c31_i32_16 = arith.constant 31 : i32
    %46 = tpu.dynamic_rotate %42 by %c31_i32_16 dim 1 : vector<32x32xf32>, i32 -> vector<32x32xf32>
    %47 = vector.broadcast %6 : vector<1x32xf32> to vector<32x32xf32>
    %48 = arith.mulf %46, %47 : vector<32x32xf32>
    %49 = tpu.concatenate %45, %42, %48 in 0 : vector<32x32xf32>, vector<32x32xf32>, vector<32x32xf32> -> vector<96x32xf32>
    %c0_17 = arith.constant 0 : index
    %c0_18 = arith.constant 0 : index
    %50 = vector.load %arg3[%c0_17, %c0_18] : memref<32x96xf32, #tpu.memory_space<vmem>>, vector<32x96xf32>
    %cst_19 = arith.constant dense<0.000000e+00> : vector<32x32xf32>
    %51 = tpu.matmul %50, %49, %cst_19 {dimension_numbers = #tpu.dot_dimension_numbers<[1], [0], [0], [1], [0, 0, 1, 1], [], []>} : vector<32x96xf32>, vector<96x32xf32>, vector<32x32xf32> -> vector<32x32xf32>
    %52 = vector.broadcast %3 : vector<32x1xf32> to vector<32x32xf32>
    %53 = arith.addf %51, %52 : vector<32x32xf32>
    %cst_20 = arith.constant 0.000000e+00 : f32
    %54 = vector.broadcast %cst_20 : f32 to vector<32x32xf32>
    %55 = arith.maximumf %53, %54 : vector<32x32xf32>
    %cst_21 = arith.constant dense<0.000000e+00> : vector<32xf32>
    %56 = vector.multi_reduction <add>, %55, %cst_21 [0] : vector<32x32xf32> to vector<32xf32>
    %57 = vector.shape_cast %56 : vector<32xf32> to vector<1x32xf32>
    %cst_22 = arith.constant 3.200000e+01 : f32
    %58 = vector.broadcast %cst_22 : f32 to vector<1x32xf32>
    %59 = arith.divf %57, %58 : vector<1x32xf32>
    %60 = arith.mulf %55, %55 : vector<32x32xf32>
    %cst_23 = arith.constant dense<0.000000e+00> : vector<32xf32>
    %61 = vector.multi_reduction <add>, %60, %cst_23 [0] : vector<32x32xf32> to vector<32xf32>
    %62 = vector.shape_cast %61 : vector<32xf32> to vector<1x32xf32>
    %cst_24 = arith.constant 3.200000e+01 : f32
    %63 = vector.broadcast %cst_24 : f32 to vector<1x32xf32>
    %64 = arith.divf %62, %63 : vector<1x32xf32>
    %65 = arith.mulf %59, %59 : vector<1x32xf32>
    %66 = arith.subf %64, %65 : vector<1x32xf32>
    %cst_25 = arith.constant 0.000000e+00 : f32
    %67 = vector.broadcast %cst_25 : f32 to vector<1x32xf32>
    %68 = arith.maximumf %66, %67 : vector<1x32xf32>
    %69 = vector.broadcast %59 : vector<1x32xf32> to vector<32x32xf32>
    %70 = arith.subf %55, %69 : vector<32x32xf32>
    %cst_26 = arith.constant 9.99999974E-6 : f32
    %71 = vector.broadcast %cst_26 : f32 to vector<1x32xf32>
    %72 = arith.addf %68, %71 : vector<1x32xf32>
    %73 = math.rsqrt %72 : vector<1x32xf32>
    %74 = vector.broadcast %73 : vector<1x32xf32> to vector<32x32xf32>
    %75 = arith.mulf %70, %74 : vector<32x32xf32>
    %c0_27 = arith.constant 0 : index
    %c0_28 = arith.constant 0 : index
    %76 = vector.load %arg5[%c0_27, %c0_28] : memref<1x32xf32, #tpu.memory_space<vmem>>, vector<1x32xf32>
    %cst_29 = arith.constant dense<0.000000e+00> : vector<1x32xf32>
    %77 = tpu.matmul %76, %75, %cst_29 {dimension_numbers = #tpu.dot_dimension_numbers<[1], [0], [0], [1], [0, 0, 1, 1], [], []>} : vector<1x32xf32>, vector<32x32xf32>, vector<1x32xf32> -> vector<1x32xf32>
    %78 = vector.broadcast %4 : vector<1x1xf32> to vector<1x32xf32>
    %79 = arith.addf %77, %78 : vector<1x32xf32>
    %c0_30 = arith.constant 0 : index
    %c0_31 = arith.constant 0 : index
    %80 = vector.load %arg7[%c0_30, %c0_31] : memref<1x32xf32, #tpu.memory_space<vmem>>, vector<1x32xf32>
    %81 = arith.mulf %79, %80 : vector<1x32xf32>
    %c0_32 = arith.constant 0 : index
    %c0_33 = arith.constant 0 : index
    %82 = vector.load %arg8[%c0_32, %c0_33] : memref<1x32xf32, #tpu.memory_space<vmem>>, vector<1x32xf32>
    tpu.vector_store %arg8[%c0_32, %c0_33], %81 {strides = array<i32>} : memref<1x32xf32, #tpu.memory_space<vmem>>, vector<1x32xf32>,
    return
  }
  func.func @transform_0(%arg0: i32) -> (i32, i32) {
    %c0_i32 = arith.constant 0 : i32
    %c0_i32_0 = arith.constant 0 : i32
    return %c0_i32, %arg0 : i32, i32
  }
  func.func @transform_1(%arg0: i32) -> (i32, i32) {
    %c0_i32 = arith.constant 0 : i32
    %c0_i32_0 = arith.constant 0 : i32
    %c0_i32_1 = arith.constant 0 : i32
    return %c0_i32, %c0_i32_0 : i32, i32
  }
  func.func @transform_2(%arg0: i32) -> (i32, i32) {
    %c0_i32 = arith.constant 0 : i32
    %c0_i32_0 = arith.constant 0 : i32
    %c0_i32_1 = arith.constant 0 : i32
    return %c0_i32, %c0_i32_0 : i32, i32
  }
  func.func @transform_3(%arg0: i32) -> (i32, i32) {
    %c0_i32 = arith.constant 0 : i32
    %c0_i32_0 = arith.constant 0 : i32
    %c0_i32_1 = arith.constant 0 : i32
    return %c0_i32, %c0_i32_0 : i32, i32
  }
  func.func @transform_4(%arg0: i32) -> (i32, i32) {
    %c0_i32 = arith.constant 0 : i32
    %c0_i32_0 = arith.constant 0 : i32
    %c0_i32_1 = arith.constant 0 : i32
    return %c0_i32, %c0_i32_0 : i32, i32
  }
  func.func @transform_5(%arg0: i32) -> (i32, i32) {
    %c0_i32 = arith.constant 0 : i32
    %c0_i32_0 = arith.constant 0 : i32
    %c0_i32_1 = arith.constant 0 : i32
    return %c0_i32, %c0_i32_0 : i32, i32
  }
  func.func @transform_6(%arg0: i32) -> (i32, i32) {
    %c0_i32 = arith.constant 0 : i32
    %c0_i32_0 = arith.constant 0 : i32
    return %c0_i32, %arg0 : i32, i32
  }
  func.func @transform_7(%arg0: i32) -> (i32, i32) {
    %c0_i32 = arith.constant 0 : i32
    %c0_i32_0 = arith.constant 0 : i32
    return %c0_i32, %arg0 : i32, i32
  }
}

</mosaic_0001>

<llo_original>
// kernel: tpu_custom_call.1
$region0: #{tpu_custom_call.1}
  #allocation0 [shape = 'u32[]', space=smem, size = 0x4, offset = 0x4, fixed_abs, tag = 'smem constant byte address 0x4 - core index']
  #allocation1 [shape = 'u32[72,128]{1,0:T(1,128)}', space=vmem, size = 0x9000, scoped, tag = 'internal scratch']
  %s0 = inlined_call_operand.vmem [shape: f32[32,32], index: 0, kind: input, shape index: {}]
  %s1 = inlined_call_operand.hbm [shape: f32[32,96], index: 1, kind: input, shape index: {}]
  %s2 = inlined_call_operand.hbm [shape: f32[32,96], index: 2, kind: input, shape index: {}]
  %s3 = inlined_call_operand.vmem [shape: f32[32,4], index: 3, kind: input, shape index: {}]
  %s4 = inlined_call_operand.vmem [shape: f32[1,32], index: 4, kind: input, shape index: {}]
  %s5 = inlined_call_operand.vmem [shape: f32[2,32], index: 5, kind: input, shape index: {}]
  %s6 = inlined_call_operand.vmem [shape: f32[1,32], index: 6, kind: input, shape index: {}]
  %s7 = inlined_call_operand.hbm [shape: f32[1,32], index: 7, kind: output, shape index: {}]
  %s8 = sld [smem:[#allocation0]]
  $region46: #{tpu_custom_call.1} parent=0
    _
  %s10 = ssub.s32 1, %s8
  %s11 = scalar_select 0, %s10, %s8
  $region1: #{tpu_custom_call.1} parent=0
    #allocation2 [shape = 'u8[16384]{0}', space=vmem, size = 0x4000, scoped, tag = 'input window, operand 1, single buffered']
    #allocation3 [shape = 's32[1]{0}', space=sflag, size = 0x4, scoped, tag = 'scoped memory for tpu_custom_call.1']
    #allocation4 [shape = 's32[1]{0}', space=sflag, size = 0x4, scoped, tag = 'scoped memory for tpu_custom_call.1']
    #allocation5 [shape = 'u8[16384]{0}', space=vmem, size = 0x4000, scoped, tag = 'input window, operand 2, single buffered']
    #allocation6 [shape = 's32[1]{0}', space=sflag, size = 0x4, scoped, tag = 'scoped memory for tpu_custom_call.1']
    #allocation7 [shape = 'u8[512]{0}', space=vmem, size = 0x400, scoped, tag = 'output window, operand 0, single buffered']
    %12 = vsyncpa [#allocation3], 0
    %13 = vsyncpa [#allocation6], 0
    %14 = vsyncpa [#allocation4], 0
    // Predicated region
    $region2: #{tpu_custom_call.1} parent=1 // pred_check
      _
    $region3: #{tpu_custom_call.1} parent=1 // pred_check_branch
      %16 = sbr.rel (0) target = $region5
    $region4: #{tpu_custom_call.1} parent=1 // pred_region
      _
    $region5: #{tpu_custom_call.1} parent=1 // pred_fallthru
      _
    // Predicated region
    $region6: #{tpu_custom_call.1} parent=1 // pred_check
      _
    $region7: #{tpu_custom_call.1} parent=1 // pred_check_branch
      %18 = sbr.rel (0) target = $region9
    $region8: #{tpu_custom_call.1} parent=1 // pred_region
      %20 = vsyncadd [#allocation3], 0
      %s21 = sshll.u32 %s1, 4
      %s22 = int_to_ptr.hbm [resolvable:$true] %s21
      %s23 = sshll.u32 [#allocation2], 4
      %s24 = int_to_ptr.vmem [resolvable:$true] %s23
      %29 = dma.hbm_to_vmem [thread:$0]  %s22, 512, %s24, [#allocation3], 128, 128, 8
    $region9: #{tpu_custom_call.1} parent=1 // pred_fallthru
      _
    // Predicated region
    $region10: #{tpu_custom_call.1} parent=1 // pred_check
      _
    $region11: #{tpu_custom_call.1} parent=1 // pred_check_branch
      %31 = sbr.rel (0) target = $region13
    $region12: #{tpu_custom_call.1} parent=1 // pred_region
      %33 = vsyncadd [#allocation6], 0
      %s34 = sshll.u32 %s2, 4
      %s35 = int_to_ptr.hbm [resolvable:$true] %s34
      %s36 = sshll.u32 [#allocation5], 4
      %s37 = int_to_ptr.vmem [resolvable:$true] %s36
      %42 = dma.hbm_to_vmem [thread:$0]  %s35, 512, %s37, [#allocation6], 128, 128, 8
    $region13: #{tpu_custom_call.1} parent=1 // pred_fallthru
      _
    // Predicated region
    $region14: #{tpu_custom_call.1} parent=1 // pred_check
      _
    $region15: #{tpu_custom_call.1} parent=1 // pred_check_branch
      %44 = sbr.rel (0) target = $region17
    $region16: #{tpu_custom_call.1} parent=1 // pred_region
      _
    $region17: #{tpu_custom_call.1} parent=1 // pred_fallthru
      _
    // Predicated region
    $region18: #{tpu_custom_call.1} parent=1 // pred_check
      _
    $region19: #{tpu_custom_call.1} parent=1 // pred_check_branch
      %46 = sbr.rel (0) target = $region21
    $region20: #{tpu_custom_call.1} parent=1 // pred_region
      _
    $region21: #{tpu_custom_call.1} parent=1 // pred_fallthru
      _
    // Predicated region
    $region22: #{tpu_custom_call.1} parent=1 // pred_check
      _
    $region23: #{tpu_custom_call.1} parent=1 // pred_check_branch
      %48 = sbr.rel (0) target = $region25
    $region24: #{tpu_custom_call.1} parent=1 // pred_region
      _
    $region25: #{tpu_custom_call.1} parent=1 // pred_fallthru
      _
    // Predicated region
    $region26: #{tpu_custom_call.1} parent=1 // pred_check
      _
    $region27: #{tpu_custom_call.1} parent=1 // pred_check_branch
      %50 = sbr.rel (0) target = $region29
    $region28: #{tpu_custom_call.1} parent=1 // pred_region
      _
    $region29: #{tpu_custom_call.1} parent=1 // pred_fallthru
      _
    // Predicated region
    $region30: #{tpu_custom_call.1} parent=1 // pred_check
      _
    $region31: #{tpu_custom_call.1} parent=1 // pred_check_branch
      %52 = sbr.rel (0) target = $region33
    $region32: #{tpu_custom_call.1} parent=1 // pred_region
      %54 = dma.done [#allocation3], 512
    $region33: #{tpu_custom_call.1} parent=1 // pred_fallthru
      _
    // Predicated region
    $region34: #{tpu_custom_call.1} parent=1 // pred_check
      _
    $region35: #{tpu_custom_call.1} parent=1 // pred_check_branch
      %56 = sbr.rel (0) target = $region37
    $region36: #{tpu_custom_call.1} parent=1 // pred_region
      %58 = dma.done [#allocation6], 512
    $region37: #{tpu_custom_call.1} parent=1 // pred_fallthru
      _
    %v59 = vld [vmem:[%s3] sm:$0xff]
    %v60 = vld [vmem:[%s3 + $0x8] sm:$0xff]
    %v61 = vld [vmem:[%s3 + $0x10] sm:$0xff]
    %v62 = vld [vmem:[%s3 + $0x18] sm:$0xff]
    %v63 = vld [vmem:[%s5] sm:$0x1]
    %v64 = vld [vmem:[%s5 + $0x1] sm:$0x1]
    %v65 = vld [vmem:[%s0] sm:$0xff]
    %v66 = vld [vmem:[%s0 + $0x8] sm:$0xff]
    %v67 = vld [vmem:[%s0 + $0x10] sm:$0xff]
    %v68 = vld [vmem:[%s0 + $0x18] sm:$0xff]
    %vm69 = vcmask 1047808
    %70 = vrot.lane.b32.xlu0 %v65, 32
    %v71 = vpop.permute.xlu0 %70
    %v72 = vsel %vm69, %v71, %v65
    %73 = vrot.lane.b32.xlu0 %v66, 32
    %v74 = vpop.permute.xlu0 %73
    %v75 = vsel %vm69, %v74, %v66
    %76 = vrot.lane.b32.xlu0 %v67, 32
    %v77 = vpop.permute.xlu0 %76
    %v78 = vsel %vm69, %v77, %v67
    %79 = vrot.lane.b32.xlu0 %v68, 32
    %v80 = vpop.permute.xlu0 %79
    %v81 = vsel %vm69, %v80, %v68
    %82 = vrot.lane.b32.xlu0 %v72, 32
    %v83 = vpop.permute.xlu0 %82
    %84 = vrot.lane.b32.xlu0 %v75, 32
    %v85 = vpop.permute.xlu0 %84
    %86 = vrot.lane.b32.xlu0 %v78, 32
    %v87 = vpop.permute.xlu0 %86
    %88 = vrot.lane.b32.xlu0 %v81, 32
    %v89 = vpop.permute.xlu0 %88
    %v90 = vsel %vm69, %v83, %v65
    %v91 = vsel %vm69, %v85, %v66
    %v92 = vsel %vm69, %v87, %v67
    %v93 = vsel %vm69, %v89, %v68
    %v94 = vperm.slane %v63, 0
    %96 = vrot.lane.b32.xlu0 %v94, 31
    %v97 = vpop.permute.xlu0 %96
    %v99 = vmul.f32 %v90, %v97
    %v100 = vmul.f32 %v91, %v97
    %v101 = vmul.f32 %v92, %v97
    %v102 = vmul.f32 %v93, %v97
    %v103 = vperm.slane %v64, 0
    %105 = vrot.lane.b32.xlu0 %v103, 1
    %v106 = vpop.permute.xlu0 %105
    %v108 = vmul.f32 %v90, %v106
    %v109 = vmul.f32 %v91, %v106
    %v110 = vmul.f32 %v92, %v106
    %v111 = vmul.f32 %v93, %v106
    %116 = vrot.lane.b32.xlu0 %v65, 31
    %v117 = vpop.permute.xlu0 %116
    %118 = vrot.lane.b32.xlu0 %v66, 31
    %v119 = vpop.permute.xlu0 %118
    %120 = vrot.lane.b32.xlu0 %v67, 31
    %v121 = vpop.permute.xlu0 %120
    %122 = vrot.lane.b32.xlu0 %v68, 31
    %v123 = vpop.permute.xlu0 %122
    %128 = vrot.lane.b32.xlu0 %v108, 30
    %v129 = vpop.permute.xlu0 %128
    %130 = vrot.lane.b32.xlu0 %v109, 30
    %v131 = vpop.permute.xlu0 %130
    %132 = vrot.lane.b32.xlu0 %v110, 30
    %v133 = vpop.permute.xlu0 %132
    %134 = vrot.lane.b32.xlu0 %v111, 30
    %v135 = vpop.permute.xlu0 %134
    %v136 = vld [vmem:[#allocation2] sm:$0xff]
    %v137 = vld [vmem:[#allocation2 + $0x8] sm:$0xff]
    %v138 = vld [vmem:[#allocation2 + $0x10] sm:$0xff]
    %v139 = vld [vmem:[#allocation2 + $0x18] sm:$0xff]
    %141 = vset.pattern.permute.xlu0 0
    %142 = vperm.xlu0 %141, %v59
    %v143 = vpop.permute.xlu0 %142
    %146 = vset.pattern.permute.xlu0 0
    %147 = vperm.xlu0 %146, %v60
    %v148 = vpop.permute.xlu0 %147
    %151 = vset.pattern.permute.xlu0 0
    %152 = vperm.xlu0 %151, %v61
    %v153 = vpop.permute.xlu0 %152
    %156 = vset.pattern.permute.xlu0 0
    %157 = vperm.xlu0 %156, %v62
    %v158 = vpop.permute.xlu0 %157
    %164 = vrot.lane.b32.xlu0 %v99, 97
    %v165 = vpop.permute.xlu0 %164
    %166 = vrot.lane.b32.xlu0 %v100, 97
    %v167 = vpop.permute.xlu0 %166
    %168 = vrot.lane.b32.xlu0 %v101, 97
    %v169 = vpop.permute.xlu0 %168
    %170 = vrot.lane.b32.xlu0 %v102, 97
    %v171 = vpop.permute.xlu0 %170
    %172 = vrot.lane.b32.xlu0 %v117, 97
    %v173 = vpop.permute.xlu0 %172
    %174 = vrot.lane.b32.xlu0 %v119, 97
    %v175 = vpop.permute.xlu0 %174
    %176 = vrot.lane.b32.xlu0 %v121, 97
    %v177 = vpop.permute.xlu0 %176
    %178 = vrot.lane.b32.xlu0 %v123, 97
    %v179 = vpop.permute.xlu0 %178
    %180 = vrot.lane.b32.xlu0 %v129, 97
    %v181 = vpop.permute.xlu0 %180
    %182 = vrot.lane.b32.xlu0 %v131, 97
    %v183 = vpop.permute.xlu0 %182
    %184 = vrot.lane.b32.xlu0 %v133, 97
    %v185 = vpop.permute.xlu0 %184
    %186 = vrot.lane.b32.xlu0 %v135, 97
    %v187 = vpop.permute.xlu0 %186
    %vm200 = vcmask 785408
    %v202 = vsel %vm200, %v136, 0
    %v205 = vsel %vm200, %v137, 0
    %v208 = vsel %vm200, %v138, 0
    %v211 = vsel %vm200, %v139, 0
    %213 = vmatpush.msra.mxu0 0.0
    %214 = vmatpush.msra.mxu0 0.0
    %215 = vmatpush.msra.mxu0 0.0
    %216 = vmatpush.msra.mxu0 0.0
    %217 = vmatpush.msra.mxu0 %v187
    %218 = vmatpush.msra.mxu0 %v185
    %219 = vmatpush.msra.mxu0 %v183
    %220 = vmatpush.msra.mxu0 %v181
    %221 = vmatpush.msra.mxu0 %v179
    %222 = vmatpush.msra.mxu0 %v177
    %223 = vmatpush.msra.mxu0 %v175
    %224 = vmatpush.msra.mxu0 %v173
    %225 = vmatpush.msra.mxu0 %v171
    %226 = vmatpush.msra.mxu0 %v169
    %227 = vmatpush.msra.mxu0 %v167
    %228 = vmatpush.msra.mxu0 %v165
    %229 = vmatmul.f32.gmra.mxu0 %v202
    %v230 = vpop.f32.mrf.mxu0
    %v231 = vadd.f32 %v143, %v230
    %232 = vmatmul.f32.gmra.mxu0 %v205
    %v233 = vpop.f32.mrf.mxu0
    %v234 = vadd.f32 %v148, %v233
    %235 = vmatmul.f32.gmra.mxu0 %v208
    %v236 = vpop.f32.mrf.mxu0
    %v237 = vadd.f32 %v153, %v236
    %238 = vmatmul.f32.gmra.mxu0 %v211
    %v239 = vpop.f32.mrf.mxu0
    %v240 = vadd.f32 %v158, %v239
    %241 = vdwg.mxu0
    %v242 = vmax.f32 %v231, 0.0
    %v243 = vmax.f32 %v234, 0.0
    %v244 = vmax.f32 %v237, 0.0
    %v245 = vmax.f32 %v240, 0.0
    %vm246 = vcmask 261120
    %v247 = vsel %vm246, %v242, 0.0
    %v248 = vsel %vm246, %v243, 0.0
    %v249 = vadd.f32 %v247, %v248
    %v250 = vsel %vm246, %v244, 0.0
    %v251 = vadd.f32 %v249, %v250
    %v252 = vsel %vm246, %v245, 0.0
    %v253 = vadd.f32 %v251, %v252
    %v254 = vrot.slane %v253, 4
    %v255 = vadd.f32 %v253, %v254
    %v256 = vrot.slane %v255, 2
    %v257 = vadd.f32 %v255, %v256
    %v258 = vrot.slane %v257, 1
    %v259 = vadd.f32 %v257, %v258
    %v260 = vrcp.pop 32.0
    %v261 = vmul.f32 32.0, %v260
    %v262 = vsub.f32 1.0, %v261
    %v263 = vmul.f32 %v260, %v262
    %v264 = vadd.f32 %v260, %v263
    %vm265 = vweird.f32 %v260
    %v266 = vsel %vm265, %v260, %v264
    %v267 = vmul.f32 %v259, %v266
    %v268 = vmul.f32 %v242, %v242
    %v269 = vmul.f32 %v243, %v243
    %v270 = vmul.f32 %v244, %v244
    %v271 = vmul.f32 %v245, %v245
    %v272 = vsel %vm246, %v268, 0.0
    %v273 = vsel %vm246, %v269, 0.0
    %v274 = vadd.f32 %v272, %v273
    %v275 = vsel %vm246, %v270, 0.0
    %v276 = vadd.f32 %v274, %v275
    %v277 = vsel %vm246, %v271, 0.0
    %v278 = vadd.f32 %v276, %v277
    %v279 = vrot.slane %v278, 4
    %v280 = vadd.f32 %v278, %v279
    %v281 = vrot.slane %v280, 2
    %v282 = vadd.f32 %v280, %v281
    %v283 = vrot.slane %v282, 1
    %v284 = vadd.f32 %v282, %v283
    %v285 = vmul.f32 %v284, %v266
    %v286 = vmul.f32 %v267, %v267
    %v287 = vsub.f32 %v285, %v286
    %v288 = vmax.f32 %v287, 0.0
    %v289 = vsub.f32 %v242, %v267
    %v290 = vsub.f32 %v243, %v267
    %v291 = vsub.f32 %v244, %v267
    %v292 = vsub.f32 %v245, %v267
    %v293 = vadd.f32 %v288, 1e-05
    %v294 = vrsqrt.pop %v293
    %v295 = vmul.f32 %v294, %v293
    %v296 = vmul.f32 %v295, %v294
    %v297 = vmul.f32 0.5, %v296
    %v298 = vsub.f32 1.5, %v297
    %v299 = vmul.f32 %v294, %v298
    %vm300 = vweird.f32 %v293
    %vm301 = vweird.f32 %v294
    %vm302 = vmor %vm300, %vm301
    %v303 = vsel %vm302, %v294, %v299
    %v304 = vmul.f32 %v289, %v303
    %v305 = vmul.f32 %v290, %v303
    %v306 = vmul.f32 %v291, %v303
    %v307 = vmul.f32 %v292, %v303
    %308 = vset.pattern.permute.xlu0 1
    %309 = vperm.xlu0 %308, %v59
    %v310 = vpop.permute.xlu0 %309
    %312 = vset.pattern.permute.xlu0 1
    %313 = vperm.xlu0 %312, %v60
    %v314 = vpop.permute.xlu0 %313
    %316 = vset.pattern.permute.xlu0 1
    %317 = vperm.xlu0 %316, %v61
    %v318 = vpop.permute.xlu0 %317
    %320 = vset.pattern.permute.xlu0 1
    %321 = vperm.xlu0 %320, %v62
    %v322 = vpop.permute.xlu0 %321
    %v324 = vadd.f32 %v304, %v310
    %v325 = vadd.f32 %v305, %v314
    %v326 = vadd.f32 %v306, %v318
    %v327 = vadd.f32 %v307, %v322
    %328 = vrot.lane.b32.xlu0 %v324, 32
    %v329 = vpop.permute.xlu0 %328
    %v330 = vsel %vm69, %v329, %v324
    %331 = vrot.lane.b32.xlu0 %v325, 32
    %v332 = vpop.permute.xlu0 %331
    %v333 = vsel %vm69, %v332, %v325
    %334 = vrot.lane.b32.xlu0 %v326, 32
    %v335 = vpop.permute.xlu0 %334
    %v336 = vsel %vm69, %v335, %v326
    %337 = vrot.lane.b32.xlu0 %v327, 32
    %v338 = vpop.permute.xlu0 %337
    %v339 = vsel %vm69, %v338, %v327
    %340 = vrot.lane.b32.xlu0 %v330, 32
    %v341 = vpop.permute.xlu0 %340
    %342 = vrot.lane.b32.xlu0 %v333, 32
    %v343 = vpop.permute.xlu0 %342
    %344 = vrot.lane.b32.xlu0 %v336, 32
    %v345 = vpop.permute.xlu0 %344
    %346 = vrot.lane.b32.xlu0 %v339, 32
    %v347 = vpop.permute.xlu0 %346
    %v348 = vsel %vm69, %v341, %v324
    %v349 = vsel %vm69, %v343, %v325
    %v350 = vsel %vm69, %v345, %v326
    %v351 = vsel %vm69, %v347, %v327
    %v352 = vmul.f32 %v348, %v97
    %v353 = vmul.f32 %v349, %v97
    %v354 = vmul.f32 %v350, %v97
    %v355 = vmul.f32 %v351, %v97
    %v356 = vmul.f32 %v348, %v106
    %v357 = vmul.f32 %v349, %v106
    %v358 = vmul.f32 %v350, %v106
    %v359 = vmul.f32 %v351, %v106
    %364 = vrot.lane.b32.xlu0 %v324, 31
    %v365 = vpop.permute.xlu0 %364
    %366 = vrot.lane.b32.xlu0 %v325, 31
    %v367 = vpop.permute.xlu0 %366
    %368 = vrot.lane.b32.xlu0 %v326, 31
    %v369 = vpop.permute.xlu0 %368
    %370 = vrot.lane.b32.xlu0 %v327, 31
    %v371 = vpop.permute.xlu0 %370
    %376 = vrot.lane.b32.xlu0 %v356, 30
    %v377 = vpop.permute.xlu0 %376
    %378 = vrot.lane.b32.xlu0 %v357, 30
    %v379 = vpop.permute.xlu0 %378
    %380 = vrot.lane.b32.xlu0 %v358, 30
    %v381 = vpop.permute.xlu0 %380
    %382 = vrot.lane.b32.xlu0 %v359, 30
    %v383 = vpop.permute.xlu0 %382
    %v384 = vld [vmem:[#allocation5] sm:$0xff]
    %v385 = vld [vmem:[#allocation5 + $0x8] sm:$0xff]
    %v386 = vld [vmem:[#allocation5 + $0x10] sm:$0xff]
    %v387 = vld [vmem:[#allocation5 + $0x18] sm:$0xff]
    %388 = vset.pattern.permute.xlu0 2
    %389 = vperm.xlu0 %388, %v59
    %v390 = vpop.permute.xlu0 %389
    %392 = vset.pattern.permute.xlu0 2
    %393 = vperm.xlu0 %392, %v60
    %v394 = vpop.permute.xlu0 %393
    %396 = vset.pattern.permute.xlu0 2
    %397 = vperm.xlu0 %396, %v61
    %v398 = vpop.permute.xlu0 %397
    %400 = vset.pattern.permute.xlu0 2
    %401 = vperm.xlu0 %400, %v62
    %v402 = vpop.permute.xlu0 %401
    %408 = vrot.lane.b32.xlu0 %v352, 97
    %v409 = vpop.permute.xlu0 %408
    %410 = vrot.lane.b32.xlu0 %v353, 97
    %v411 = vpop.permute.xlu0 %410
    %412 = vrot.lane.b32.xlu0 %v354, 97
    %v413 = vpop.permute.xlu0 %412
    %414 = vrot.lane.b32.xlu0 %v355, 97
    %v415 = vpop.permute.xlu0 %414
    %416 = vrot.lane.b32.xlu0 %v365, 97
    %v417 = vpop.permute.xlu0 %416
    %418 = vrot.lane.b32.xlu0 %v367, 97
    %v419 = vpop.permute.xlu0 %418
    %420 = vrot.lane.b32.xlu0 %v369, 97
    %v421 = vpop.permute.xlu0 %420
    %422 = vrot.lane.b32.xlu0 %v371, 97
    %v423 = vpop.permute.xlu0 %422
    %424 = vrot.lane.b32.xlu0 %v377, 97
    %v425 = vpop.permute.xlu0 %424
    %426 = vrot.lane.b32.xlu0 %v379, 97
    %v427 = vpop.permute.xlu0 %426
    %428 = vrot.lane.b32.xlu0 %v381, 97
    %v429 = vpop.permute.xlu0 %428
    %430 = vrot.lane.b32.xlu0 %v383, 97
    %v431 = vpop.permute.xlu0 %430
    %v445 = vsel %vm200, %v384, 0
    %v448 = vsel %vm200, %v385, 0
    %v451 = vsel %vm200, %v386, 0
    %v454 = vsel %vm200, %v387, 0
    %456 = vmatpush.msra.mxu0 0.0
    %457 = vmatpush.msra.mxu0 0.0
    %458 = vmatpush.msra.mxu0 0.0
    %459 = vmatpush.msra.mxu0 0.0
    %460 = vmatpush.msra.mxu0 %v431
    %461 = vmatpush.msra.mxu0 %v429
    %462 = vmatpush.msra.mxu0 %v427
    %463 = vmatpush.msra.mxu0 %v425
    %464 = vmatpush.msra.mxu0 %v423
    %465 = vmatpush.msra.mxu0 %v421
    %466 = vmatpush.msra.mxu0 %v419
    %467 = vmatpush.msra.mxu0 %v417
    %468 = vmatpush.msra.mxu0 %v415
    %469 = vmatpush.msra.mxu0 %v413
    %470 = vmatpush.msra.mxu0 %v411
    %471 = vmatpush.msra.mxu0 %v409
    %472 = vmatmul.f32.gmra.mxu0 %v445
    %v473 = vpop.f32.mrf.mxu0
    %v474 = vadd.f32 %v390, %v473
    %475 = vmatmul.f32.gmra.mxu0 %v448
    %v476 = vpop.f32.mrf.mxu0
    %v477 = vadd.f32 %v394, %v476
    %478 = vmatmul.f32.gmra.mxu0 %v451
    %v479 = vpop.f32.mrf.mxu0
    %v480 = vadd.f32 %v398, %v479
    %481 = vmatmul.f32.gmra.mxu0 %v454
    %v482 = vpop.f32.mrf.mxu0
    %v483 = vadd.f32 %v402, %v482
    %484 = vdwg.mxu0
    %v485 = vmax.f32 %v474, 0.0
    %v486 = vmax.f32 %v477, 0.0
    %v487 = vmax.f32 %v480, 0.0
    %v488 = vmax.f32 %v483, 0.0
    %v489 = vsel %vm246, %v485, 0.0
    %v490 = vsel %vm246, %v486, 0.0
    %v491 = vadd.f32 %v489, %v490
    %v492 = vsel %vm246, %v487, 0.0
    %v493 = vadd.f32 %v491, %v492
    %v494 = vsel %vm246, %v488, 0.0
    %v495 = vadd.f32 %v493, %v494
    %v496 = vrot.slane %v495, 4
    %v497 = vadd.f32 %v495, %v496
    %v498 = vrot.slane %v497, 2
    %v499 = vadd.f32 %v497, %v498
    %v500 = vrot.slane %v499, 1
    %v501 = vadd.f32 %v499, %v500
    %v502 = vmul.f32 %v501, %v266
    %v503 = vmul.f32 %v485, %v485
    %v504 = vmul.f32 %v486, %v486
    %v505 = vmul.f32 %v487, %v487
    %v506 = vmul.f32 %v488, %v488
    %v507 = vsel %vm246, %v503, 0.0
    %v508 = vsel %vm246, %v504, 0.0
    %v509 = vadd.f32 %v507, %v508
    %v510 = vsel %vm246, %v505, 0.0
    %v511 = vadd.f32 %v509, %v510
    %v512 = vsel %vm246, %v506, 0.0
    %v513 = vadd.f32 %v511, %v512
    %v514 = vrot.slane %v513, 4
    %v515 = vadd.f32 %v513, %v514
    %v516 = vrot.slane %v515, 2
    %v517 = vadd.f32 %v515, %v516
    %v518 = vrot.slane %v517, 1
    %v519 = vadd.f32 %v517, %v518
    %v520 = vmul.f32 %v519, %v266
    %v521 = vmul.f32 %v502, %v502
    %v522 = vsub.f32 %v520, %v521
    %v523 = vmax.f32 %v522, 0.0
    %v524 = vsub.f32 %v485, %v502
    %v525 = vsub.f32 %v486, %v502
    %v526 = vsub.f32 %v487, %v502
    %v527 = vsub.f32 %v488, %v502
    %v528 = vadd.f32 %v523, 1e-05
    %v529 = vrsqrt.pop %v528
    %v530 = vmul.f32 %v529, %v528
    %v531 = vmul.f32 %v530, %v529
    %v532 = vmul.f32 0.5, %v531
    %v533 = vsub.f32 1.5, %v532
    %v534 = vmul.f32 %v529, %v533
    %vm535 = vweird.f32 %v528
    %vm536 = vweird.f32 %v529
    %vm537 = vmor %vm535, %vm536
    %v538 = vsel %vm537, %v529, %v534
    %v539 = vmul.f32 %v524, %v538
    %v540 = vmul.f32 %v525, %v538
    %v541 = vmul.f32 %v526, %v538
    %v542 = vmul.f32 %v527, %v538
    %v543 = vld [vmem:[%s4] sm:$0x1]
    %544 = vset.pattern.permute.xlu0 3
    %545 = vperm.xlu0 %544, %v59
    %v546 = vpop.permute.xlu0 %545
    %v549 = vsel %vm246, %v543, 0
    %551 = vmatpush.msra.mxu0 0.0
    %552 = vmatpush.msra.mxu0 0.0
    %553 = vmatpush.msra.mxu0 0.0
    %554 = vmatpush.msra.mxu0 0.0
    %555 = vmatpush.msra.mxu0 0.0
    %556 = vmatpush.msra.mxu0 0.0
    %557 = vmatpush.msra.mxu0 0.0
    %558 = vmatpush.msra.mxu0 0.0
    %559 = vmatpush.msra.mxu0 0.0
    %560 = vmatpush.msra.mxu0 0.0
    %561 = vmatpush.msra.mxu0 0.0
    %562 = vmatpush.msra.mxu0 0.0
    %563 = vmatpush.msra.mxu0 %v542
    %564 = vmatpush.msra.mxu0 %v541
    %565 = vmatpush.msra.mxu0 %v540
    %566 = vmatpush.msra.mxu0 %v539
    %567 = vmatmul.f32.gmra.mxu0 %v549
    %v568 = vpop.f32.mrf.mxu0
    %v569 = vadd.f32 %v546, %v568
    %570 = vdwg.mxu0
    %v571 = vld [vmem:[%s6] sm:$0x1]
    %v572 = vmul.f32 %v569, %v571
    %vm573 = vcmask 253952
    %574 = vst.msk [vmem:[#allocation7] sm:$0x1] %vm573, %v572
    // Predicated region
    $region38: #{tpu_custom_call.1} parent=1 // pred_check
      _
    $region39: #{tpu_custom_call.1} parent=1 // pred_check_branch
      %576 = sbr.rel (0) target = $region41
    $region40: #{tpu_custom_call.1} parent=1 // pred_region
      %578 = vsyncadd [#allocation4], 0
      %s580 = sshll.u32 [#allocation7], 4
      %s581 = int_to_ptr.vmem [resolvable:$true] %s580
      %s582 = sshll.u32 %s7, 4
      %s583 = int_to_ptr.hbm [resolvable:$true] %s582
      %585 = dma.vmem_to_hbm [thread:$0]  %s581, 16, %s583, [#allocation4]
    $region41: #{tpu_custom_call.1} parent=1 // pred_fallthru
      _
    // Predicated region
    $region42: #{tpu_custom_call.1} parent=1 // pred_check
      _
    $region43: #{tpu_custom_call.1} parent=1 // pred_check_branch
      %587 = sbr.rel (0) target = $region45
    $region44: #{tpu_custom_call.1} parent=1 // pred_region
      %589 = dma.done [#allocation4], 16
    $region45: #{tpu_custom_call.1} parent=1 // pred_fallthru
      _
    %590 = vsyncpa [#allocation3], 1
    %591 = vsyncpa [#allocation6], 1
    %592 = vsyncpa [#allocation4], 1

</llo_original>
